<compile_context>
chip_gen: v5e
topology: v5e:2x2
jax: 0.10.0
libtpu: 0.0.40
codegen_flags: <defaults>
</compile_context>

<pallas_src>
import functools

import jax
import jax.numpy as jnp
from jax.experimental import pallas as pl
from jax.experimental.pallas import tpu as pltpu


def mlp_kernel(params_ref, x_ref, o_ref, *, hidden):
    # x_ref: (block_rows, 128) f32 lane-dense batch tile.
    # params_ref: flat f32 SMEM vector [w1 (H), b1 (H), w2 (H), b2 (1)].
    x = x_ref[...]
    # j = 0 term initializes the accumulator and folds in the fc2 bias (b2):
    # saves the zeros init, one full-tile add in the loop, and the final bias add.
    h0 = jnp.maximum(x * params_ref[0] + params_ref[hidden], 0.0)
    acc = h0 * params_ref[2 * hidden] + params_ref[3 * hidden]
    for j in range(1, hidden):                  # fully unrolled: pure VPU FMAs, no MXU
        h = jnp.maximum(x * params_ref[j] + params_ref[hidden + j], 0.0)   # fc1 + ReLU
        acc = acc + h * params_ref[2 * hidden + j]                          # fc2 accum
    o_ref[...] = acc


def pack_params(w1, b1, w2, b2):
    # Called ONCE at init (hoisted out of the per-call path per perf review).
    return jnp.concatenate(
        [w1.reshape(-1), b1.reshape(-1), w2.reshape(-1), b2.reshape(-1)]
    ).astype(jnp.float32)


@functools.partial(jax.jit, static_argnames=("hidden",))
def net_forward(params, x, *, hidden):
    n, in_features = x.shape
    assert in_features == 1, "Net.fc1 has in_features == 1"

    lanes, sub = 128, 8                       # vreg = (8 sublane, 128 lane)
    max_block_rows = 512                      # 512*128*4B = 256 KiB per buffer

    # Rows of the lane-dense slab (multiple of 8 sublanes, at least one vreg).
    raw_rows = max(sub, -(-pl.cdiv(n, lanes) // sub) * sub)

    # Block size scales with the batch instead of a fixed (8,128) tile.
    block_rows = min(raw_rows, max_block_rows)
    # Give v7x's two TensorCores >= 2 balanced grid steps once there is enough work.
    if raw_rows >= 2 * sub and raw_rows // block_rows < 2:
        block_rows = max(sub, (raw_rows // 2) // sub * sub)

    rows = pl.cdiv(raw_rows, block_rows) * block_rows   # pad rows to whole blocks
    n_pad = rows * lanes
    grid = (rows // block_rows,)

    # Lane-dense layout: batch on the lane axis.  Pad/reshape fuse with the
    # pallas_call because everything lives inside this single jit.
    x_flat = jnp.pad(x.reshape(-1).astype(jnp.float32), (0, n_pad - n))
    x2 = x_flat.reshape(rows, lanes)

    kernel = functools.partial(mlp_kernel, hidden=hidden)

    out = pl.pallas_call(
        kernel,
        out_shape=jax.ShapeDtypeStruct((rows, lanes), jnp.float32),
        grid_spec=pltpu.PrefetchScalarGridSpec(
            num_scalar_prefetch=1,
            grid=grid,
            in_specs=[pl.BlockSpec((block_rows, lanes), lambda i, p: (i, 0))],
            out_specs=pl.BlockSpec((block_rows, lanes), lambda i, p: (i, 0)),
        ),
        compiler_params=pltpu.CompilerParams(
            dimension_semantics=("parallel",),
        ),
        cost_estimate=pl.CostEstimate(
            flops=5 * hidden * n_pad,          # mul+add+max (fc1/ReLU) + mul+add (fc2)
            transcendentals=0,
            bytes_accessed=2 * 4 * n_pad + 4 * (3 * hidden + 1),
        ),
    )(params, x2)

    # Restore the PyTorch (N, 1) contract.  Padded tail rows hold garbage
    # (sum relu(b1_j)*w2_j + b2) and are sliced off here; this slice is static
    # under jit and fuses with the kernel's output copy.
    return out.reshape(-1)[:n].reshape(n, 1)


def init_params(key):
    # Deterministic init mimicking PyTorch nn.Linear default:
    # U(-1/sqrt(fan_in), 1/sqrt(fan_in)). Weights stored transposed
    # (in_features, out_features) so the math is x @ W + b.
    k1, k2, k3, k4 = jax.random.split(key, 4)
    in1, hid, out = 1, 10, 1
    b1_bound = 1.0 / jnp.sqrt(jnp.float32(in1))
    b2_bound = 1.0 / jnp.sqrt(jnp.float32(hid))
    w1 = jax.random.uniform(k1, (in1, hid), jnp.float32, -b1_bound, b1_bound)  # (1, 10)
    b1 = jax.random.uniform(k2, (1, hid), jnp.float32, -b1_bound, b1_bound)    # (1, 10)
    w2 = jax.random.uniform(k3, (hid, out), jnp.float32, -b2_bound, b2_bound)  # (10, 1)
    b2 = jax.random.uniform(k4, (1, out), jnp.float32, -b2_bound, b2_bound)    # (1, 1)
    return w1, b1, w2, b2


if __name__ == "__main__":
    key = jax.random.PRNGKey(0)

    # Input matching the module's usage: torch.unsqueeze(torch.linspace(-1, 1, 100), dim=1)
    x = jnp.linspace(-1.0, 1.0, 100, dtype=jnp.float32).reshape(100, 1)

    w1, b1, w2, b2 = init_params(key)
    params = pack_params(w1, b1, w2, b2)      # packed once, outside the hot path

    y = net_forward(params, x, hidden=10)
    y = jax.block_until_ready(y)

    # Pure-JAX reference for correctness.
    h_ref = jnp.maximum(x @ w1 + b1, 0.0)
    y_ref = h_ref @ w2 + b2
    assert y.shape == (100, 1)
    assert jnp.allclose(y, y_ref, atol=1e-5, rtol=1e-5)

    print("KERNEL_OK")
</pallas_src>

<mosaic_0001>
module attributes {stable_mosaic.version = 11 : i64} {
  func.func @mlp_kernel(%arg0: i32, %arg1: memref<31xf32, #tpu.memory_space<smem>>, %arg2: memref<8x128xf32, #tpu.memory_space<vmem>>, %arg3: memref<8x128xf32, #tpu.memory_space<vmem>>) attributes {dimension_semantics = [#tpu.dimension_semantics<parallel>], iteration_bounds = array<i64: 1>, scalar_prefetch = 1 : i64, scratch_operands = 0 : i64, tpu.core_type = #tpu.core_type<tc>, window_params = [{transform_indices = @transform_0, window_bounds = array<i64: 8, 128>}, {transform_indices = @transform_1, window_bounds = array<i64: 8, 128>}]} {
    %c0 = arith.constant 0 : index
    %c0_0 = arith.constant 0 : index
    %0 = vector.load %arg2[%c0, %c0_0] : memref<8x128xf32, #tpu.memory_space<vmem>>, vector<8x128xf32>
    %c0_1 = arith.constant 0 : index
    %1 = memref.load %arg1[%c0_1] : memref<31xf32, #tpu.memory_space<smem>>
    %2 = vector.broadcast %1 : f32 to vector<8x128xf32>
    %3 = arith.mulf %0, %2 : vector<8x128xf32>
    %c10 = arith.constant 10 : index
    %4 = memref.load %arg1[%c10] : memref<31xf32, #tpu.memory_space<smem>>
    %5 = vector.broadcast %4 : f32 to vector<8x128xf32>
    %6 = arith.addf %3, %5 : vector<8x128xf32>
    %cst = arith.constant 0.000000e+00 : f32
    %7 = vector.broadcast %cst : f32 to vector<8x128xf32>
    %8 = arith.maximumf %6, %7 : vector<8x128xf32>
    %c20 = arith.constant 20 : index
    %9 = memref.load %arg1[%c20] : memref<31xf32, #tpu.memory_space<smem>>
    %10 = vector.broadcast %9 : f32 to vector<8x128xf32>
    %11 = arith.mulf %8, %10 : vector<8x128xf32>
    %c30 = arith.constant 30 : index
    %12 = memref.load %arg1[%c30] : memref<31xf32, #tpu.memory_space<smem>>
    %13 = vector.broadcast %12 : f32 to vector<8x128xf32>
    %14 = arith.addf %11, %13 : vector<8x128xf32>
    %c1 = arith.constant 1 : index
    %15 = memref.load %arg1[%c1] : memref<31xf32, #tpu.memory_space<smem>>
    %16 = vector.broadcast %15 : f32 to vector<8x128xf32>
    %17 = arith.mulf %0, %16 : vector<8x128xf32>
    %c11 = arith.constant 11 : index
    %18 = memref.load %arg1[%c11] : memref<31xf32, #tpu.memory_space<smem>>
    %19 = vector.broadcast %18 : f32 to vector<8x128xf32>
    %20 = arith.addf %17, %19 : vector<8x128xf32>
    %cst_2 = arith.constant 0.000000e+00 : f32
    %21 = vector.broadcast %cst_2 : f32 to vector<8x128xf32>
    %22 = arith.maximumf %20, %21 : vector<8x128xf32>
    %c21 = arith.constant 21 : index
    %23 = memref.load %arg1[%c21] : memref<31xf32, #tpu.memory_space<smem>>
    %24 = vector.broadcast %23 : f32 to vector<8x128xf32>
    %25 = arith.mulf %22, %24 : vector<8x128xf32>
    %26 = arith.addf %14, %25 : vector<8x128xf32>
    %c2 = arith.constant 2 : index
    %27 = memref.load %arg1[%c2] : memref<31xf32, #tpu.memory_space<smem>>
    %28 = vector.broadcast %27 : f32 to vector<8x128xf32>
    %29 = arith.mulf %0, %28 : vector<8x128xf32>
    %c12 = arith.constant 12 : index
    %30 = memref.load %arg1[%c12] : memref<31xf32, #tpu.memory_space<smem>>
    %31 = vector.broadcast %30 : f32 to vector<8x128xf32>
    %32 = arith.addf %29, %31 : vector<8x128xf32>
    %cst_3 = arith.constant 0.000000e+00 : f32
    %33 = vector.broadcast %cst_3 : f32 to vector<8x128xf32>
    %34 = arith.maximumf %32, %33 : vector<8x128xf32>
    %c22 = arith.constant 22 : index
    %35 = memref.load %arg1[%c22] : memref<31xf32, #tpu.memory_space<smem>>
    %36 = vector.broadcast %35 : f32 to vector<8x128xf32>
    %37 = arith.mulf %34, %36 : vector<8x128xf32>
    %38 = arith.addf %26, %37 : vector<8x128xf32>
    %c3 = arith.constant 3 : index
    %39 = memref.load %arg1[%c3] : memref<31xf32, #tpu.memory_space<smem>>
    %40 = vector.broadcast %39 : f32 to vector<8x128xf32>
    %41 = arith.mulf %0, %40 : vector<8x128xf32>
    %c13 = arith.constant 13 : index
    %42 = memref.load %arg1[%c13] : memref<31xf32, #tpu.memory_space<smem>>
    %43 = vector.broadcast %42 : f32 to vector<8x128xf32>
    %44 = arith.addf %41, %43 : vector<8x128xf32>
    %cst_4 = arith.constant 0.000000e+00 : f32
    %45 = vector.broadcast %cst_4 : f32 to vector<8x128xf32>
    %46 = arith.maximumf %44, %45 : vector<8x128xf32>
    %c23 = arith.constant 23 : index
    %47 = memref.load %arg1[%c23] : memref<31xf32, #tpu.memory_space<smem>>
    %48 = vector.broadcast %47 : f32 to vector<8x128xf32>
    %49 = arith.mulf %46, %48 : vector<8x128xf32>
    %50 = arith.addf %38, %49 : vector<8x128xf32>
    %c4 = arith.constant 4 : index
    %51 = memref.load %arg1[%c4] : memref<31xf32, #tpu.memory_space<smem>>
    %52 = vector.broadcast %51 : f32 to vector<8x128xf32>
    %53 = arith.mulf %0, %52 : vector<8x128xf32>
    %c14 = arith.constant 14 : index
    %54 = memref.load %arg1[%c14] : memref<31xf32, #tpu.memory_space<smem>>
    %55 = vector.broadcast %54 : f32 to vector<8x128xf32>
    %56 = arith.addf %53, %55 : vector<8x128xf32>
    %cst_5 = arith.constant 0.000000e+00 : f32
    %57 = vector.broadcast %cst_5 : f32 to vector<8x128xf32>
    %58 = arith.maximumf %56, %57 : vector<8x128xf32>
    %c24 = arith.constant 24 : index
    %59 = memref.load %arg1[%c24] : memref<31xf32, #tpu.memory_space<smem>>
    %60 = vector.broadcast %59 : f32 to vector<8x128xf32>
    %61 = arith.mulf %58, %60 : vector<8x128xf32>
    %62 = arith.addf %50, %61 : vector<8x128xf32>
    %c5 = arith.constant 5 : index
    %63 = memref.load %arg1[%c5] : memref<31xf32, #tpu.memory_space<smem>>
    %64 = vector.broadcast %63 : f32 to vector<8x128xf32>
    %65 = arith.mulf %0, %64 : vector<8x128xf32>
    %c15 = arith.constant 15 : index
    %66 = memref.load %arg1[%c15] : memref<31xf32, #tpu.memory_space<smem>>
    %67 = vector.broadcast %66 : f32 to vector<8x128xf32>
    %68 = arith.addf %65, %67 : vector<8x128xf32>
    %cst_6 = arith.constant 0.000000e+00 : f32
    %69 = vector.broadcast %cst_6 : f32 to vector<8x128xf32>
    %70 = arith.maximumf %68, %69 : vector<8x128xf32>
    %c25 = arith.constant 25 : index
    %71 = memref.load %arg1[%c25] : memref<31xf32, #tpu.memory_space<smem>>
    %72 = vector.broadcast %71 : f32 to vector<8x128xf32>
    %73 = arith.mulf %70, %72 : vector<8x128xf32>
    %74 = arith.addf %62, %73 : vector<8x128xf32>
    %c6 = arith.constant 6 : index
    %75 = memref.load %arg1[%c6] : memref<31xf32, #tpu.memory_space<smem>>
    %76 = vector.broadcast %75 : f32 to vector<8x128xf32>
    %77 = arith.mulf %0, %76 : vector<8x128xf32>
    %c16 = arith.constant 16 : index
    %78 = memref.load %arg1[%c16] : memref<31xf32, #tpu.memory_space<smem>>
    %79 = vector.broadcast %78 : f32 to vector<8x128xf32>
    %80 = arith.addf %77, %79 : vector<8x128xf32>
    %cst_7 = arith.constant 0.000000e+00 : f32
    %81 = vector.broadcast %cst_7 : f32 to vector<8x128xf32>
    %82 = arith.maximumf %80, %81 : vector<8x128xf32>
    %c26 = arith.constant 26 : index
    %83 = memref.load %arg1[%c26] : memref<31xf32, #tpu.memory_space<smem>>
    %84 = vector.broadcast %83 : f32 to vector<8x128xf32>
    %85 = arith.mulf %82, %84 : vector<8x128xf32>
    %86 = arith.addf %74, %85 : vector<8x128xf32>
    %c7 = arith.constant 7 : index
    %87 = memref.load %arg1[%c7] : memref<31xf32, #tpu.memory_space<smem>>
    %88 = vector.broadcast %87 : f32 to vector<8x128xf32>
    %89 = arith.mulf %0, %88 : vector<8x128xf32>
    %c17 = arith.constant 17 : index
    %90 = memref.load %arg1[%c17] : memref<31xf32, #tpu.memory_space<smem>>
    %91 = vector.broadcast %90 : f32 to vector<8x128xf32>
    %92 = arith.addf %89, %91 : vector<8x128xf32>
    %cst_8 = arith.constant 0.000000e+00 : f32
    %93 = vector.broadcast %cst_8 : f32 to vector<8x128xf32>
    %94 = arith.maximumf %92, %93 : vector<8x128xf32>
    %c27 = arith.constant 27 : index
    %95 = memref.load %arg1[%c27] : memref<31xf32, #tpu.memory_space<smem>>
    %96 = vector.broadcast %95 : f32 to vector<8x128xf32>
    %97 = arith.mulf %94, %96 : vector<8x128xf32>
    %98 = arith.addf %86, %97 : vector<8x128xf32>
    %c8 = arith.constant 8 : index
    %99 = memref.load %arg1[%c8] : memref<31xf32, #tpu.memory_space<smem>>
    %100 = vector.broadcast %99 : f32 to vector<8x128xf32>
    %101 = arith.mulf %0, %100 : vector<8x128xf32>
    %c18 = arith.constant 18 : index
    %102 = memref.load %arg1[%c18] : memref<31xf32, #tpu.memory_space<smem>>
    %103 = vector.broadcast %102 : f32 to vector<8x128xf32>
    %104 = arith.addf %101, %103 : vector<8x128xf32>
    %cst_9 = arith.constant 0.000000e+00 : f32
    %105 = vector.broadcast %cst_9 : f32 to vector<8x128xf32>
    %106 = arith.maximumf %104, %105 : vector<8x128xf32>
    %c28 = arith.constant 28 : index
    %107 = memref.load %arg1[%c28] : memref<31xf32, #tpu.memory_space<smem>>
    %108 = vector.broadcast %107 : f32 to vector<8x128xf32>
    %109 = arith.mulf %106, %108 : vector<8x128xf32>
    %110 = arith.addf %98, %109 : vector<8x128xf32>
    %c9 = arith.constant 9 : index
    %111 = memref.load %arg1[%c9] : memref<31xf32, #tpu.memory_space<smem>>
    %112 = vector.broadcast %111 : f32 to vector<8x128xf32>
    %113 = arith.mulf %0, %112 : vector<8x128xf32>
    %c19 = arith.constant 19 : index
    %114 = memref.load %arg1[%c19] : memref<31xf32, #tpu.memory_space<smem>>
    %115 = vector.broadcast %114 : f32 to vector<8x128xf32>
    %116 = arith.addf %113, %115 : vector<8x128xf32>
    %cst_10 = arith.constant 0.000000e+00 : f32
    %117 = vector.broadcast %cst_10 : f32 to vector<8x128xf32>
    %118 = arith.maximumf %116, %117 : vector<8x128xf32>
    %c29 = arith.constant 29 : index
    %119 = memref.load %arg1[%c29] : memref<31xf32, #tpu.memory_space<smem>>
    %120 = vector.broadcast %119 : f32 to vector<8x128xf32>
    %121 = arith.mulf %118, %120 : vector<8x128xf32>
    %122 = arith.addf %110, %121 : vector<8x128xf32>
    %c0_11 = arith.constant 0 : index
    %c0_12 = arith.constant 0 : index
    %123 = vector.load %arg3[%c0_11, %c0_12] : memref<8x128xf32, #tpu.memory_space<vmem>>, vector<8x128xf32>
    tpu.vector_store %arg3[%c0_11, %c0_12], %122 {strides = array<i32>} : memref<8x128xf32, #tpu.memory_space<vmem>>, vector<8x128xf32>,
    return
  }
  func.func @transform_0(%arg0: i32, %arg1: memref<31xf32, #tpu.memory_space<smem>>) -> (i32, i32) {
    %c0_i32 = arith.constant 0 : i32
    %c0_i32_0 = arith.constant 0 : i32
    return %arg0, %c0_i32 : i32, i32
  }
  func.func @transform_1(%arg0: i32, %arg1: memref<31xf32, #tpu.memory_space<smem>>) -> (i32, i32) {
    %c0_i32 = arith.constant 0 : i32
    %c0_i32_0 = arith.constant 0 : i32
    return %arg0, %c0_i32 : i32, i32
  }
}

</mosaic_0001>

<llo_original>
// kernel: net_forward.1
$region0: #{net_forward.1}
  #allocation0 [shape = 'u32[]', space=smem, size = 0x4, offset = 0x4, fixed_abs, tag = 'smem constant byte address 0x4 - core index']
  #allocation1 [shape = 'u32[72,128]{1,0:T(1,128)}', space=vmem, size = 0x9000, scoped, tag = 'internal scratch']
  #allocation2 [shape = 's32[1]{0}', space=sflag, size = 0x4, scoped, tag = 'scoped memory for net_forward.1']
  #allocation3 [shape = 'u8[512]{0}', space=smem, size = 0x200, scoped, tag = 'prefetched SMEM operand 0']
  %s0 = inlined_call_operand.vmem [shape: f32[31], index: 0, kind: input, shape index: {}]
  %s1 = inlined_call_operand.vmem [shape: f32[8,128], index: 1, kind: input, shape index: {}]
  %s2 = inlined_call_operand.vmem [shape: f32[8,128], index: 2, kind: output, shape index: {}]
  %s3 = sld [smem:[#allocation0]]
  $region14: #{net_forward.1} parent=0
    _
  %s5 = ssub.s32 1, %s3
  %s6 = scalar_select 0, %s5, %s3
  %s8 = sshll.u32 %s0, 4
  %s9 = int_to_ptr.vmem [resolvable:$true] %s8
  %11 = dma.vmem_to_smem %s9, 16, [#allocation3], [#allocation2]
  %13 = dma.done [#allocation2], 16
  %14 = sfence
  // Predicated region
  $region2: #{net_forward.1} parent=0 // pred_check
    _
  $region3: #{net_forward.1} parent=0 // pred_check_branch
    %16 = sbr.rel (0) target = $region5
  $region4: #{net_forward.1} parent=0 // pred_region
    _
  $region5: #{net_forward.1} parent=0 // pred_fallthru
    _
  %v17 = vld [vmem:[%s1] sm:$0xff]
  %s18 = sld [smem:[#allocation3]]
  %v19 = vstv %s18
  %v20 = vmul.f32 %v17, %v19
  %s21 = sld [smem:[#allocation3 + $0xa]]
  %v22 = vstv %s21
  %v23 = vadd.f32 %v20, %v22
  %v24 = vmax.f32 %v23, 0.0
  %s25 = sld [smem:[#allocation3 + $0x14]]
  %v26 = vstv %s25
  %v27 = vmul.f32 %v24, %v26
  %s28 = sld [smem:[#allocation3 + $0x1e]]
  %v29 = vstv %s28
  %v30 = vadd.f32 %v27, %v29
  %s31 = sld [smem:[#allocation3 + $0x1]]
  %v32 = vstv %s31
  %v33 = vmul.f32 %v17, %v32
  %s34 = sld [smem:[#allocation3 + $0xb]]
  %v35 = vstv %s34
  %v36 = vadd.f32 %v33, %v35
  %v37 = vmax.f32 %v36, 0.0
  %s38 = sld [smem:[#allocation3 + $0x15]]
  %v39 = vstv %s38
  %v40 = vmul.f32 %v37, %v39
  %v41 = vadd.f32 %v30, %v40
  %s42 = sld [smem:[#allocation3 + $0x2]]
  %v43 = vstv %s42
  %v44 = vmul.f32 %v17, %v43
  %s45 = sld [smem:[#allocation3 + $0xc]]
  %v46 = vstv %s45
  %v47 = vadd.f32 %v44, %v46
  %v48 = vmax.f32 %v47, 0.0
  %s49 = sld [smem:[#allocation3 + $0x16]]
  %v50 = vstv %s49
  %v51 = vmul.f32 %v48, %v50
  %v52 = vadd.f32 %v41, %v51
  %s53 = sld [smem:[#allocation3 + $0x3]]
  %v54 = vstv %s53
  %v55 = vmul.f32 %v17, %v54
  %s56 = sld [smem:[#allocation3 + $0xd]]
  %v57 = vstv %s56
  %v58 = vadd.f32 %v55, %v57
  %v59 = vmax.f32 %v58, 0.0
  %s60 = sld [smem:[#allocation3 + $0x17]]
  %v61 = vstv %s60
  %v62 = vmul.f32 %v59, %v61
  %v63 = vadd.f32 %v52, %v62
  %s64 = sld [smem:[#allocation3 + $0x4]]
  %v65 = vstv %s64
  %v66 = vmul.f32 %v17, %v65
  %s67 = sld [smem:[#allocation3 + $0xe]]
  %v68 = vstv %s67
  %v69 = vadd.f32 %v66, %v68
  %v70 = vmax.f32 %v69, 0.0
  %s71 = sld [smem:[#allocation3 + $0x18]]
  %v72 = vstv %s71
  %v73 = vmul.f32 %v70, %v72
  %v74 = vadd.f32 %v63, %v73
  %s75 = sld [smem:[#allocation3 + $0x5]]
  %v76 = vstv %s75
  %v77 = vmul.f32 %v17, %v76
  %s78 = sld [smem:[#allocation3 + $0xf]]
  %v79 = vstv %s78
  %v80 = vadd.f32 %v77, %v79
  %v81 = vmax.f32 %v80, 0.0
  %s82 = sld [smem:[#allocation3 + $0x19]]
  %v83 = vstv %s82
  %v84 = vmul.f32 %v81, %v83
  %v85 = vadd.f32 %v74, %v84
  %s86 = sld [smem:[#allocation3 + $0x6]]
  %v87 = vstv %s86
  %v88 = vmul.f32 %v17, %v87
  %s89 = sld [smem:[#allocation3 + $0x10]]
  %v90 = vstv %s89
  %v91 = vadd.f32 %v88, %v90
  %v92 = vmax.f32 %v91, 0.0
  %s93 = sld [smem:[#allocation3 + $0x1a]]
  %v94 = vstv %s93
  %v95 = vmul.f32 %v92, %v94
  %v96 = vadd.f32 %v85, %v95
  %s97 = sld [smem:[#allocation3 + $0x7]]
  %v98 = vstv %s97
  %v99 = vmul.f32 %v17, %v98
  %s100 = sld [smem:[#allocation3 + $0x11]]
  %v101 = vstv %s100
  %v102 = vadd.f32 %v99, %v101
  %v103 = vmax.f32 %v102, 0.0
  %s104 = sld [smem:[#allocation3 + $0x1b]]
  %v105 = vstv %s104
  %v106 = vmul.f32 %v103, %v105
  %v107 = vadd.f32 %v96, %v106
  %s108 = sld [smem:[#allocation3 + $0x8]]
  %v109 = vstv %s108
  %v110 = vmul.f32 %v17, %v109
  %s111 = sld [smem:[#allocation3 + $0x12]]
  %v112 = vstv %s111
  %v113 = vadd.f32 %v110, %v112
  %v114 = vmax.f32 %v113, 0.0
  %s115 = sld [smem:[#allocation3 + $0x1c]]
  %v116 = vstv %s115
  %v117 = vmul.f32 %v114, %v116
  %v118 = vadd.f32 %v107, %v117
  %s119 = sld [smem:[#allocation3 + $0x9]]
  %v120 = vstv %s119
  %v121 = vmul.f32 %v17, %v120
  %s122 = sld [smem:[#allocation3 + $0x13]]
  %v123 = vstv %s122
  %v124 = vadd.f32 %v121, %v123
  %v125 = vmax.f32 %v124, 0.0
  %s126 = sld [smem:[#allocation3 + $0x1d]]
  %v127 = vstv %s126
  %v128 = vmul.f32 %v125, %v127
  %v129 = vadd.f32 %v118, %v128
  %130 = vst [vmem:[%s2] sm:$0xff] %v129
  // Predicated region
  $region6: #{net_forward.1} parent=0 // pred_check
    _
  $region7: #{net_forward.1} parent=0 // pred_check_branch
    %132 = sbr.rel (0) target = $region9
  $region8: #{net_forward.1} parent=0 // pred_region
    _
  $region9: #{net_forward.1} parent=0 // pred_fallthru
    _
  // Predicated region
  $region10: #{net_forward.1} parent=0 // pred_check
    _
  $region11: #{net_forward.1} parent=0 // pred_check_branch
    %134 = sbr.rel (0) target = $region13
  $region12: #{net_forward.1} parent=0 // pred_region
    _
  $region13: #{net_forward.1} parent=0 // pred_fallthru
    _

</llo_original>
